<compile_context>
chip_gen: v6e
topology: v6e:2x2x1
jax: 0.10.0
libtpu: 0.0.40
codegen_flags: <defaults>
</compile_context>

<pallas_src>
import functools

import numpy as np

import jax
import jax.numpy as jnp
from jax.experimental import pallas as pl
from jax.experimental.pallas import tpu as pltpu


# ----------------------------- kernels ----------------------------------------


def _embed_kernel_vf(x_ref, pf_ref, wv_ref, wf_ref, b_ref, o_ref):
    """out = x @ Wv + pf @ Wf + bias for one (tm, tn) tile, f32 accumulation."""
    acc = jnp.dot(x_ref[...], wv_ref[...], preferred_element_type=jnp.float32)
    acc = acc + jnp.dot(pf_ref[...], wf_ref[...],
                        preferred_element_type=jnp.float32)
    o_ref[...] = (acc + b_ref[...].astype(jnp.float32)).astype(o_ref.dtype)


def _embed_kernel_v(x_ref, wv_ref, b_ref, o_ref):
    """out = x @ Wv + bias for one (tm, tn) tile, f32 accumulation."""
    acc = jnp.dot(x_ref[...], wv_ref[...], preferred_element_type=jnp.float32)
    o_ref[...] = (acc + b_ref[...].astype(jnp.float32)).astype(o_ref.dtype)


# ------------------------- tile / VMEM sizing ----------------------------------


def _round_up(x, mult):
    return ((x + mult - 1) // mult) * mult


def _vmem_capacity_bytes():
    """Physical VMEM per core; conservative fallback if the query fails."""
    try:
        info = pltpu.get_tpu_info()
        for name in ("vmem_capacity_bytes", "vmem_size_bytes", "vmem_bytes"):
            cap = getattr(info, name, None)
            if cap:
                return int(cap)
    except Exception:
        pass
    return 64 * 1024 * 1024  # v7x per-core VMEM (smallest of the generations)


def _tile_vmem_bytes(tm, tn, k_dims, in_bytes, out_bytes):
    """Physical tiled footprint (lane/sublane padded), double-buffered."""
    tn_pad = _round_up(tn, 128)
    total = 0
    for k in k_dims:
        total += 2 * tm * _round_up(k, 128) * in_bytes        # activation tile
        total += 2 * _round_up(k, 8) * tn_pad * in_bytes      # weight tile
    total += 2 * 8 * tn_pad * in_bytes                        # bias tile
    total += 2 * tm * tn_pad * out_bytes                      # output tile
    return total


def _choose_tiles(m, n, k_dims, in_bytes, out_bytes, vmem_cap):
    """Pick (tm, tn, vmem_limit).  tm mult of 8; tn == n or a multiple of 128."""
    # Output tile width: unpadded full N when it fits one tile (masked vst into
    # VMEM is cheap -- vst slot has huge slack), else 128-multiple over the
    # unpadded output with the cdiv grid masking the ragged last j tile.
    tn = n if n <= 2048 else 1024

    budget = vmem_cap // 2

    # Big row tiles amortize per-step grid overhead (kernel is HBM-bound), but
    # keep >= 4 M-steps when m is large enough so both v7x TensorCores get work
    # and input-DMA / compute / output-DMA overlap.
    tm_cap = 2048 if vmem_cap >= (100 << 20) else 1024
    tm = min(tm_cap, _round_up(m, 8))
    if m >= 256:
        tm = min(tm, _round_up(pl.cdiv(m, 4), 8))
    tm = max(tm, 8)

    while tm > 8 and _tile_vmem_bytes(tm, tn, k_dims, in_bytes, out_bytes) > budget:
        tm = max(8, _round_up(tm // 2, 8))
    while tn > 128 and _tile_vmem_bytes(tm, tn, k_dims, in_bytes, out_bytes) > budget:
        tn = max(128, _round_up(tn // 2, 128))

    working_set = _tile_vmem_bytes(tm, tn, k_dims, in_bytes, out_bytes)
    # Scoped VMEM ~ 2x working set (Mosaic scratch headroom), generous floor,
    # never most of the core -- leaves room for neighboring fusions on v7x.
    vmem_limit = int(min(vmem_cap * 3 // 4, max(16 << 20, 2 * working_set)))
    return tm, tn, vmem_limit


# ----------------------------- pallas wrapper -----------------------------------


@functools.partial(jax.jit,
                   static_argnames=("tm", "tn", "vmem_limit", "out_dtype"))
def _embed_pallas(inputs, position_features, wv, wf, bias, *,
                  tm, tn, vmem_limit, out_dtype):
    b, s, input_dim = inputs.shape
    m = b * s
    n = wv.shape[1]
    x2d = inputs.reshape(m, input_dim)

    grid = (pl.cdiv(m, tm), pl.cdiv(n, tn))

    in_specs = [pl.BlockSpec((tm, input_dim), lambda i, j: (i, 0))]
    operands = [x2d]
    if position_features is not None:
        pf2d = position_features.reshape(m, -1)
        pf_dim = pf2d.shape[1]
        in_specs.append(pl.BlockSpec((tm, pf_dim), lambda i, j: (i, 0)))
        operands.append(pf2d)
        in_specs.append(pl.BlockSpec((input_dim, tn), lambda i, j: (0, j)))
        operands.append(wv)
        in_specs.append(pl.BlockSpec((pf_dim, tn), lambda i, j: (0, j)))
        operands.append(wf)
        kernel = _embed_kernel_vf
        k_total = input_dim + pf_dim
    else:
        in_specs.append(pl.BlockSpec((input_dim, tn), lambda i, j: (0, j)))
        operands.append(wv)
        kernel = _embed_kernel_v
        k_total = input_dim
    in_specs.append(pl.BlockSpec((1, tn), lambda i, j: (0, j)))
    operands.append(bias)

    in_bytes = np.dtype(x2d.dtype).itemsize
    out_bytes = np.dtype(out_dtype).itemsize
    cost = pl.CostEstimate(
        flops=2 * m * k_total * n + m * n,
        transcendentals=0,
        bytes_accessed=(m * k_total * in_bytes + k_total * n * in_bytes
                        + n * in_bytes + m * n * out_bytes),
    )

    out2d = pl.pallas_call(
        kernel,
        out_shape=jax.ShapeDtypeStruct((m, n), out_dtype),
        grid_spec=pltpu.PrefetchScalarGridSpec(
            num_scalar_prefetch=0,
            grid=grid,
            in_specs=in_specs,
            out_specs=pl.BlockSpec((tm, tn), lambda i, j: (i, j)),
        ),
        compiler_params=pltpu.CompilerParams(
            dimension_semantics=("parallel", "parallel"),
            vmem_limit_bytes=vmem_limit,
        ),
        cost_estimate=cost,
    )(*operands)

    return out2d.reshape(b, s, n)


def simple_cna_embedding(params, inputs, position_features=None, *,
                         out_dtype=None):
    """Pallas equivalent of SimpleCnaEmbedding.forward.

    inputs:            (batch, seqlen, input_dim)
    position_features: (batch, seqlen, positional_feature_size) or None
    returns:           (batch, seqlen, embed_dim)
    """
    wv, bv = params["wv"], params["bv"]
    wf, bf = params.get("wf"), params.get("bf")

    if wf is not None and position_features is None:
        # Mirrors the PyTorch module: feature_embeddings(None) would fail.
        raise ValueError(
            "module has feature_embeddings but position_features is None")
    use_pf = wf is not None and position_features is not None

    b, s, input_dim = inputs.shape
    m = b * s
    embed_dim = wv.shape[1]
    out_dt = np.dtype(out_dtype) if out_dtype is not None \
        else np.dtype(inputs.dtype)
    in_bytes = np.dtype(inputs.dtype).itemsize

    bias = bv.reshape(1, -1)
    k_dims = [input_dim]
    if use_pf:
        bias = bias + bf.reshape(1, -1)   # tiny (1, embed_dim) add, negligible
        k_dims.append(wf.shape[0])

    cap = _vmem_capacity_bytes()
    tm, tn, vmem_limit = _choose_tiles(m, embed_dim, k_dims, in_bytes,
                                       out_dt.itemsize, cap)

    return _embed_pallas(
        inputs,
        position_features if use_pf else None,
        wv,
        wf if use_pf else None,
        bias,
        tm=tm, tn=tn, vmem_limit=vmem_limit, out_dtype=out_dt,
    )


# ------------------------ deterministic param init -----------------------------


def init_params(key, input_dim, embed_dim, positional_feature_size=None,
                dtype=jnp.float32):
    """Mimic nn.Linear init (uniform(-1/sqrt(fan_in), 1/sqrt(fan_in)))."""
    k1, k2, k3, k4 = jax.random.split(key, 4)
    bound_v = 1.0 / (input_dim ** 0.5)
    params = {
        # stored as (in_features, out_features) == W_pt.T
        "wv": jax.random.uniform(k1, (input_dim, embed_dim), dtype,
                                 -bound_v, bound_v),
        "bv": jax.random.uniform(k2, (1, embed_dim), dtype, -bound_v, bound_v),
        "wf": None,
        "bf": None,
    }
    if positional_feature_size is not None:
        bound_f = 1.0 / (positional_feature_size ** 0.5)
        params["wf"] = jax.random.uniform(
            k3, (positional_feature_size, embed_dim), dtype, -bound_f, bound_f)
        params["bf"] = jax.random.uniform(
            k4, (1, embed_dim), dtype, -bound_f, bound_f)
    return params


# --------------------------------- main -----------------------------------------


if __name__ == "__main__":
    batch, seqlen = 2, 8
    input_dim, embed_dim, pf_size = 4, 32, 3

    key = jax.random.PRNGKey(0)
    kp, kx, kf = jax.random.split(key, 3)

    params = init_params(kp, input_dim, embed_dim, pf_size)
    params_nopf = {"wv": params["wv"], "bv": params["bv"]}

    inputs = jax.random.normal(kx, (batch, seqlen, input_dim), jnp.float32)
    pos_feats = jax.random.normal(kf, (batch, seqlen, pf_size), jnp.float32)

    # Reference in plain JAX (same math as the PyTorch module).
    ref = (inputs @ params["wv"] + params["bv"].reshape(-1)
           + pos_feats @ params["wf"] + params["bf"].reshape(-1))

    # Fused path with positional feature embeddings.
    out = jax.block_until_ready(simple_cna_embedding(params, inputs, pos_feats))
    assert out.shape == (batch, seqlen, embed_dim)
    assert jnp.allclose(out, ref, atol=1e-5, rtol=1e-5)

    # Module without feature_embeddings (value-only path, no dummy operands).
    out_v = jax.block_until_ready(simple_cna_embedding(params_nopf, inputs))
    ref_v = inputs @ params["wv"] + params["bv"].reshape(-1)
    assert jnp.allclose(out_v, ref_v, atol=1e-5, rtol=1e-5)

    # Larger M: multi-step M grid (>= 4 steps, ragged last row tile).
    b2, s2 = 4, 384
    x2 = jax.random.normal(kx, (b2, s2, input_dim), jnp.float32)
    pf2 = jax.random.normal(kf, (b2, s2, pf_size), jnp.float32)
    ref2 = (x2 @ params["wv"] + params["bv"].reshape(-1)
            + pf2 @ params["wf"] + params["bf"].reshape(-1))
    out2 = jax.block_until_ready(simple_cna_embedding(params, x2, pf2))
    assert jnp.allclose(out2, ref2, atol=1e-5, rtol=1e-5)

    # bf16 OUTPUT (the real write-bandwidth lever); accumulation stays f32.
    out_bf = jax.block_until_ready(
        simple_cna_embedding(params, inputs, pos_feats,
                             out_dtype=jnp.bfloat16))
    assert out_bf.dtype == jnp.bfloat16
    assert jnp.allclose(out_bf.astype(jnp.float32), ref, atol=3e-2, rtol=3e-2)

    print("KERNEL_OK")
</pallas_src>

<mosaic_0001>
module attributes {stable_mosaic.version = 11 : i64} {
  func.func @_embed_kernel_vf(%arg0: i32, %arg1: i32, %arg2: memref<16x4xf32, #tpu.memory_space<vmem>>, %arg3: memref<16x3xf32, #tpu.memory_space<vmem>>, %arg4: memref<4x32xf32, #tpu.memory_space<vmem>>, %arg5: memref<3x32xf32, #tpu.memory_space<vmem>>, %arg6: memref<1x32xf32, #tpu.memory_space<vmem>>, %arg7: memref<16x32xf32, #tpu.memory_space<vmem>>) attributes {dimension_semantics = [#tpu.dimension_semantics<parallel>, #tpu.dimension_semantics<parallel>], iteration_bounds = array<i64: 1, 1>, scalar_prefetch = 0 : i64, scratch_operands = 0 : i64, tpu.core_type = #tpu.core_type<tc>, window_params = [{transform_indices = @transform_0, window_bounds = array<i64: 16, 4>}, {transform_indices = @transform_1, window_bounds = array<i64: 16, 3>}, {transform_indices = @transform_2, window_bounds = array<i64: 4, 32>}, {transform_indices = @transform_3, window_bounds = array<i64: 3, 32>}, {transform_indices = @transform_4, window_bounds = array<i64: 1, 32>}, {transform_indices = @transform_5, window_bounds = array<i64: 16, 32>}]} {
    %c0 = arith.constant 0 : index
    %c0_0 = arith.constant 0 : index
    %0 = vector.load %arg2[%c0, %c0_0] : memref<16x4xf32, #tpu.memory_space<vmem>>, vector<16x4xf32>
    %c0_1 = arith.constant 0 : index
    %c0_2 = arith.constant 0 : index
    %1 = vector.load %arg4[%c0_1, %c0_2] : memref<4x32xf32, #tpu.memory_space<vmem>>, vector<4x32xf32>
    %cst = arith.constant dense<0.000000e+00> : vector<16x32xf32>
    %2 = tpu.matmul %0, %1, %cst {dimension_numbers = #tpu.dot_dimension_numbers<[1], [0], [0], [1], [0, 0, 1, 1], [], []>} : vector<16x4xf32>, vector<4x32xf32>, vector<16x32xf32> -> vector<16x32xf32>
    %c0_3 = arith.constant 0 : index
    %c0_4 = arith.constant 0 : index
    %3 = vector.load %arg3[%c0_3, %c0_4] : memref<16x3xf32, #tpu.memory_space<vmem>>, vector<16x3xf32>
    %c0_5 = arith.constant 0 : index
    %c0_6 = arith.constant 0 : index
    %4 = vector.load %arg5[%c0_5, %c0_6] : memref<3x32xf32, #tpu.memory_space<vmem>>, vector<3x32xf32>
    %cst_7 = arith.constant dense<0.000000e+00> : vector<16x32xf32>
    %5 = tpu.matmul %3, %4, %cst_7 {dimension_numbers = #tpu.dot_dimension_numbers<[1], [0], [0], [1], [0, 0, 1, 1], [], []>} : vector<16x3xf32>, vector<3x32xf32>, vector<16x32xf32> -> vector<16x32xf32>
    %6 = arith.addf %2, %5 : vector<16x32xf32>
    %c0_8 = arith.constant 0 : index
    %c0_9 = arith.constant 0 : index
    %7 = vector.load %arg6[%c0_8, %c0_9] : memref<1x32xf32, #tpu.memory_space<vmem>>, vector<1x32xf32>
    %8 = vector.broadcast %7 : vector<1x32xf32> to vector<16x32xf32>
    %9 = arith.addf %6, %8 : vector<16x32xf32>
    %c0_10 = arith.constant 0 : index
    %c0_11 = arith.constant 0 : index
    %10 = vector.load %arg7[%c0_10, %c0_11] : memref<16x32xf32, #tpu.memory_space<vmem>>, vector<16x32xf32>
    tpu.vector_store %arg7[%c0_10, %c0_11], %9 {strides = array<i32>} : memref<16x32xf32, #tpu.memory_space<vmem>>, vector<16x32xf32>,
    return
  }
  func.func @transform_0(%arg0: i32, %arg1: i32) -> (i32, i32) {
    %c0_i32 = arith.constant 0 : i32
    %c0_i32_0 = arith.constant 0 : i32
    return %arg0, %c0_i32 : i32, i32
  }
  func.func @transform_1(%arg0: i32, %arg1: i32) -> (i32, i32) {
    %c0_i32 = arith.constant 0 : i32
    %c0_i32_0 = arith.constant 0 : i32
    return %arg0, %c0_i32 : i32, i32
  }
  func.func @transform_2(%arg0: i32, %arg1: i32) -> (i32, i32) {
    %c0_i32 = arith.constant 0 : i32
    %c0_i32_0 = arith.constant 0 : i32
    return %c0_i32, %arg1 : i32, i32
  }
  func.func @transform_3(%arg0: i32, %arg1: i32) -> (i32, i32) {
    %c0_i32 = arith.constant 0 : i32
    %c0_i32_0 = arith.constant 0 : i32
    return %c0_i32, %arg1 : i32, i32
  }
  func.func @transform_4(%arg0: i32, %arg1: i32) -> (i32, i32) {
    %c0_i32 = arith.constant 0 : i32
    %c0_i32_0 = arith.constant 0 : i32
    return %c0_i32, %arg1 : i32, i32
  }
  func.func @transform_5(%arg0: i32, %arg1: i32) -> (i32, i32) {
    %c0_i32 = arith.constant 0 : i32
    return %arg0, %arg1 : i32, i32
  }
}

</mosaic_0001>

<llo_original>
// kernel: _embed_pallas.1
$region0: #{_embed_pallas.1}
  #allocation0 [shape = 'u32[]', space=smem, size = 0x4, offset = 0x4, fixed_abs, tag = 'smem constant byte address 0x4 - core index']
  #allocation1 [shape = 'u32[144,128]{1,0:T(1,128)}', space=vmem, size = 0x12000, scoped, tag = 'internal scratch']
  %s0 = inlined_call_operand.vmem [shape: f32[16,4], index: 0, kind: input, shape index: {}]
  %s1 = inlined_call_operand.vmem [shape: f32[16,3], index: 1, kind: input, shape index: {}]
  %s2 = inlined_call_operand.vmem [shape: f32[4,32], index: 2, kind: input, shape index: {}]
  %s3 = inlined_call_operand.vmem [shape: f32[3,32], index: 3, kind: input, shape index: {}]
  %s4 = inlined_call_operand.vmem [shape: f32[1,32], index: 4, kind: input, shape index: {}]
  %s5 = inlined_call_operand.hbm [shape: f32[16,32], index: 5, kind: output, shape index: {}]
  %s6 = sld [smem:[#allocation0]]
  $region30: #{_embed_pallas.1} parent=0
    _
  %s8 = ssub.s32 1, %s6
  %s9 = scalar_select 0, %s8, %s6
  $region1: #{_embed_pallas.1} parent=0
    #allocation2 [shape = 'u8[8192]{0}', space=vmem, size = 0x2000, scoped, tag = 'output window, operand 0, single buffered']
    #allocation3 [shape = 's32[1]{0}', space=sflag, size = 0x4, scoped, tag = 'scoped memory for _embed_pallas.1']
    %10 = vsyncpa [#allocation3], 0
    // Predicated region
    $region2: #{_embed_pallas.1} parent=1 // pred_check
      _
    $region3: #{_embed_pallas.1} parent=1 // pred_check_branch
      %12 = sbr.rel (0) target = $region5
    $region4: #{_embed_pallas.1} parent=1 // pred_region
      _
    $region5: #{_embed_pallas.1} parent=1 // pred_fallthru
      _
    // Predicated region
    $region6: #{_embed_pallas.1} parent=1 // pred_check
      _
    $region7: #{_embed_pallas.1} parent=1 // pred_check_branch
      %14 = sbr.rel (0) target = $region9
    $region8: #{_embed_pallas.1} parent=1 // pred_region
      _
    $region9: #{_embed_pallas.1} parent=1 // pred_fallthru
      _
    // Predicated region
    $region10: #{_embed_pallas.1} parent=1 // pred_check
      _
    $region11: #{_embed_pallas.1} parent=1 // pred_check_branch
      %16 = sbr.rel (0) target = $region13
    $region12: #{_embed_pallas.1} parent=1 // pred_region
      _
    $region13: #{_embed_pallas.1} parent=1 // pred_fallthru
      _
    // Predicated region
    $region14: #{_embed_pallas.1} parent=1 // pred_check
      _
    $region15: #{_embed_pallas.1} parent=1 // pred_check_branch
      %18 = sbr.rel (0) target = $region17
    $region16: #{_embed_pallas.1} parent=1 // pred_region
      _
    $region17: #{_embed_pallas.1} parent=1 // pred_fallthru
      _
    // Predicated region
    $region18: #{_embed_pallas.1} parent=1 // pred_check
      _
    $region19: #{_embed_pallas.1} parent=1 // pred_check_branch
      %20 = sbr.rel (0) target = $region21
    $region20: #{_embed_pallas.1} parent=1 // pred_region
      _
    $region21: #{_embed_pallas.1} parent=1 // pred_fallthru
      _
    %v21 = vld [vmem:[%s0] sm:$0xff]
    %v22 = vld [vmem:[%s0 + $0x8] sm:$0xff]
    %v23 = vld [vmem:[%s2] sm:$0xf]
    %v24 = vld [vmem:[%s1] sm:$0xff]
    %v25 = vld [vmem:[%s1 + $0x8] sm:$0xff]
    %v26 = vld [vmem:[%s3] sm:$0x7]
    %vm27 = vcmask 23552
    %v29 = vsel %vm27, %v24, 0
    %v32 = vsel %vm27, %v25, 0
    %vm34 = vcmask 1042432
    %v36 = vsel %vm34, %v26, 0
    %38 = vmatprep.subr.mxu0 0.0
    %39 = vmatpush1.msra.mxu0 0.0
    %40 = vmatprep.subr.mxu0 0.0
    %41 = vmatpush1.msra.mxu0 0.0
    %42 = vmatprep.subr.mxu0 0.0
    %43 = vmatpush1.msra.mxu0 0.0
    %44 = vmatprep.subr.mxu0 0.0
    %45 = vmatpush1.msra.mxu0 0.0
    %46 = vmatprep.subr.mxu0 0.0
    %47 = vmatpush1.msra.mxu0 0.0
    %48 = vmatprep.subr.mxu0 0.0
    %49 = vmatpush1.msra.mxu0 0.0
    %50 = vmatprep.subr.mxu0 0.0
    %51 = vmatpush1.msra.mxu0 0.0
    %52 = vmatprep.subr.mxu0 0.0
    %53 = vmatpush1.msra.mxu0 0.0
    %54 = vmatprep.subr.mxu0 0.0
    %55 = vmatpush1.msra.mxu0 0.0
    %56 = vmatprep.subr.mxu0 0.0
    %57 = vmatpush1.msra.mxu0 0.0
    %58 = vmatprep.subr.mxu0 0.0
    %59 = vmatpush1.msra.mxu0 0.0
    %60 = vmatprep.subr.mxu0 0.0
    %61 = vmatpush1.msra.mxu0 0.0
    %62 = vmatprep.subr.mxu0 0.0
    %63 = vmatpush1.msra.mxu0 0.0
    %64 = vmatprep.subr.mxu0 0.0
    %65 = vmatpush1.msra.mxu0 0.0
    %66 = vmatprep.subr.mxu0 0.0
    %67 = vmatpush1.msra.mxu0 0.0
    %68 = vmatprep.subr.mxu0 0.0
    %69 = vmatpush1.msra.mxu0 %v36
    %70 = vmatprep.subr.mxu0 0.0
    %71 = vmatpush2.msra.mxu0 0.0
    %72 = vmatprep.subr.mxu0 0.0
    %73 = vmatpush2.msra.mxu0 0.0
    %74 = vmatprep.subr.mxu0 0.0
    %75 = vmatpush2.msra.mxu0 0.0
    %76 = vmatprep.subr.mxu0 0.0
    %77 = vmatpush2.msra.mxu0 0.0
    %78 = vmatprep.subr.mxu0 0.0
    %79 = vmatpush2.msra.mxu0 0.0
    %80 = vmatprep.subr.mxu0 0.0
    %81 = vmatpush2.msra.mxu0 0.0
    %82 = vmatprep.subr.mxu0 0.0
    %83 = vmatpush2.msra.mxu0 0.0
    %84 = vmatprep.subr.mxu0 0.0
    %85 = vmatpush2.msra.mxu0 0.0
    %86 = vmatprep.subr.mxu0 0.0
    %87 = vmatpush2.msra.mxu0 0.0
    %88 = vmatprep.subr.mxu0 0.0
    %89 = vmatpush2.msra.mxu0 0.0
    %90 = vmatprep.subr.mxu0 0.0
    %91 = vmatpush2.msra.mxu0 0.0
    %92 = vmatprep.subr.mxu0 0.0
    %93 = vmatpush2.msra.mxu0 0.0
    %94 = vmatprep.subr.mxu0 0.0
    %95 = vmatpush2.msra.mxu0 0.0
    %96 = vmatprep.subr.mxu0 0.0
    %97 = vmatpush2.msra.mxu0 0.0
    %98 = vmatprep.subr.mxu0 0.0
    %99 = vmatpush2.msra.mxu0 0.0
    %100 = vmatprep.subr.mxu0 0.0
    %101 = vmatpush2.msra.mxu0 0.0
    %102 = vmatprep.mubr.f32.mxu0 0.0
    %103 = vmatmul.mubr.f32.gmra.mxu0 %v29
    %v104 = vpop.f32.mrf.mxu0
    %v105 = vadd.f32 0.0, %v104
    %v106 = vpop.f32.mrf.mxu0
    %107 = vmatprep.mubr.f32.mxu0 0.0
    %108 = vmatmul.mubr.f32.gmra.mxu0 %v32
    %v109 = vpop.f32.mrf.mxu0
    %v110 = vadd.f32 0.0, %v109
    %v111 = vpop.f32.mrf.mxu0
    %112 = vdwg.mxu0
    %vm113 = vcmask 31744
    %v115 = vsel %vm113, %v21, 0
    %v118 = vsel %vm113, %v22, 0
    %vm120 = vcmask 1043456
    %v122 = vsel %vm120, %v23, 0
    %124 = vmatprep.subr.mxu0 0.0
    %125 = vmatpush1.msra.mxu0 0.0
    %126 = vmatprep.subr.mxu0 0.0
    %127 = vmatpush1.msra.mxu0 0.0
    %128 = vmatprep.subr.mxu0 0.0
    %129 = vmatpush1.msra.mxu0 0.0
    %130 = vmatprep.subr.mxu0 0.0
    %131 = vmatpush1.msra.mxu0 0.0
    %132 = vmatprep.subr.mxu0 0.0
    %133 = vmatpush1.msra.mxu0 0.0
    %134 = vmatprep.subr.mxu0 0.0
    %135 = vmatpush1.msra.mxu0 0.0
    %136 = vmatprep.subr.mxu0 0.0
    %137 = vmatpush1.msra.mxu0 0.0
    %138 = vmatprep.subr.mxu0 0.0
    %139 = vmatpush1.msra.mxu0 0.0
    %140 = vmatprep.subr.mxu0 0.0
    %141 = vmatpush1.msra.mxu0 0.0
    %142 = vmatprep.subr.mxu0 0.0
    %143 = vmatpush1.msra.mxu0 0.0
    %144 = vmatprep.subr.mxu0 0.0
    %145 = vmatpush1.msra.mxu0 0.0
    %146 = vmatprep.subr.mxu0 0.0
    %147 = vmatpush1.msra.mxu0 0.0
    %148 = vmatprep.subr.mxu0 0.0
    %149 = vmatpush1.msra.mxu0 0.0
    %150 = vmatprep.subr.mxu0 0.0
    %151 = vmatpush1.msra.mxu0 0.0
    %152 = vmatprep.subr.mxu0 0.0
    %153 = vmatpush1.msra.mxu0 0.0
    %154 = vmatprep.subr.mxu0 0.0
    %155 = vmatpush1.msra.mxu0 %v122
    %156 = vmatprep.subr.mxu0 0.0
    %157 = vmatpush2.msra.mxu0 0.0
    %158 = vmatprep.subr.mxu0 0.0
    %159 = vmatpush2.msra.mxu0 0.0
    %160 = vmatprep.subr.mxu0 0.0
    %161 = vmatpush2.msra.mxu0 0.0
    %162 = vmatprep.subr.mxu0 0.0
    %163 = vmatpush2.msra.mxu0 0.0
    %164 = vmatprep.subr.mxu0 0.0
    %165 = vmatpush2.msra.mxu0 0.0
    %166 = vmatprep.subr.mxu0 0.0
    %167 = vmatpush2.msra.mxu0 0.0
    %168 = vmatprep.subr.mxu0 0.0
    %169 = vmatpush2.msra.mxu0 0.0
    %170 = vmatprep.subr.mxu0 0.0
    %171 = vmatpush2.msra.mxu0 0.0
    %172 = vmatprep.subr.mxu0 0.0
    %173 = vmatpush2.msra.mxu0 0.0
    %174 = vmatprep.subr.mxu0 0.0
    %175 = vmatpush2.msra.mxu0 0.0
    %176 = vmatprep.subr.mxu0 0.0
    %177 = vmatpush2.msra.mxu0 0.0
    %178 = vmatprep.subr.mxu0 0.0
    %179 = vmatpush2.msra.mxu0 0.0
    %180 = vmatprep.subr.mxu0 0.0
    %181 = vmatpush2.msra.mxu0 0.0
    %182 = vmatprep.subr.mxu0 0.0
    %183 = vmatpush2.msra.mxu0 0.0
    %184 = vmatprep.subr.mxu0 0.0
    %185 = vmatpush2.msra.mxu0 0.0
    %186 = vmatprep.subr.mxu0 0.0
    %187 = vmatpush2.msra.mxu0 0.0
    %188 = vmatprep.mubr.f32.mxu0 0.0
    %189 = vmatmul.mubr.f32.gmra.mxu0 %v115
    %v190 = vpop.f32.mrf.mxu0
    %v191 = vadd.f32 %v105, %v190
    %v192 = vpop.f32.mrf.mxu0
    %193 = vmatprep.mubr.f32.mxu0 0.0
    %194 = vmatmul.mubr.f32.gmra.mxu0 %v118
    %v195 = vpop.f32.mrf.mxu0
    %v196 = vadd.f32 %v110, %v195
    %v197 = vpop.f32.mrf.mxu0
    %198 = vdwg.mxu0
    %v199 = vld [vmem:[%s4] sm:$0x1]
    %v201 = vlaneseq
    %v202 = vshrl.u32 %v201, 7
    %v203 = vsub.s32 0, %v202
    %v204 = vrot.slane %v199, %v203
    %v206 = vadd.f32 %v191, %v204
    %v207 = vadd.f32 %v196, %v204
    %vm208 = vcmask 261120
    %209 = vst.msk [vmem:[#allocation2] sm:$0xff] %vm208, %v206
    %210 = vst.msk [vmem:[#allocation2 + $0x8] sm:$0xff] %vm208, %v207
    // Predicated region
    $region22: #{_embed_pallas.1} parent=1 // pred_check
      _
    $region23: #{_embed_pallas.1} parent=1 // pred_check_branch
      %212 = sbr.rel (0) target = $region25
    $region24: #{_embed_pallas.1} parent=1 // pred_region
      %s214 = ssub.s32 256, 256
      %215 = vsyncadd [#allocation3], %s214
      %s216 = sshll.u32 [#allocation2], 4
      %s217 = int_to_ptr.vmem [resolvable:$true] %s216
      %222 = dma.vmem_to_hbm [thread:$0]  %s217, 256, %s5, [#allocation3], 128, 128, 8
    $region25: #{_embed_pallas.1} parent=1 // pred_fallthru
      _
    // Predicated region
    $region26: #{_embed_pallas.1} parent=1 // pred_check
      _
    $region27: #{_embed_pallas.1} parent=1 // pred_check_branch
      %224 = sbr.rel (0) target = $region29
    $region28: #{_embed_pallas.1} parent=1 // pred_region
      %225 = dma.done [#allocation3], 256
    $region29: #{_embed_pallas.1} parent=1 // pred_fallthru
      _
    %226 = vsyncpa [#allocation3], 1

</llo_original>
